<compile_context>
chip_gen: v5e
topology: v5e:2x2
jax: 0.10.0
libtpu: 0.0.40
codegen_flags: <defaults>
</compile_context>

<pallas_src>
import math

import jax
import jax.numpy as jnp
from jax.experimental import pallas as pl
from jax.experimental.pallas import tpu as pltpu


def _make_attention_kernel(n_heads: int, head_dim: int, seq_len: int, q_tile: int):
    scale = 1.0 / math.sqrt(head_dim)
    C = n_heads * head_dim
    T = seq_len
    TQ = q_tile
    NEG = float(jnp.finfo(jnp.float32).min)   # finite fill (no NaN if a row were fully masked)

    def kernel(x_ref, wqT_ref, bq_ref, wkT_ref, bk_ref, wvT_ref, bv_ref,
               wpT_ref, bp_ref, out_ref):
        # x_ref: (T, C) in compute dtype (leading batch dim squeezed away)
        x = x_ref[...]
        q_start = pl.multiple_of(pl.program_id(1) * TQ, TQ)
        xq = x_ref[pl.ds(q_start, TQ), :]                       # (TQ, C) query rows only

        # q/k/v projections: y = x @ W^T + b, f32 accumulation on the MXU.
        q = jnp.dot(xq, wqT_ref[...], preferred_element_type=jnp.float32) + bq_ref[...]
        k = jnp.dot(x,  wkT_ref[...], preferred_element_type=jnp.float32) + bk_ref[...]
        v = jnp.dot(x,  wvT_ref[...], preferred_element_type=jnp.float32) + bv_ref[...]

        # Fold the 1/sqrt(D) scale into q (TQ*C mults instead of H*TQ*T).
        q = q * scale

        # Split heads once: (rows, C) -> (H, rows, D); keep MXU operands in bf16.
        cdt = x.dtype
        qh = q.reshape(TQ, n_heads, head_dim).transpose(1, 0, 2).astype(cdt)   # (H, TQ, D)
        kh = k.reshape(T,  n_heads, head_dim).transpose(1, 0, 2).astype(cdt)   # (H, T,  D)
        vh = v.reshape(T,  n_heads, head_dim).transpose(1, 0, 2).astype(cdt)   # (H, T,  D)

        # All-head scores in one batched matmul: (H, TQ, T), f32.
        s = jnp.einsum('hqd,hkd->hqk', qh, kh, preferred_element_type=jnp.float32)

        # Causal mask for this query tile (global row index accounts for tile offset).
        row = pl.program_id(1) * TQ + jax.lax.broadcasted_iota(jnp.int32, (TQ, T), 0)
        col = jax.lax.broadcasted_iota(jnp.int32, (TQ, T), 1)
        s = jnp.where((row >= col)[None, :, :], s, NEG)

        # Numerically stable softmax in f32; divide goes to the EUP slot.
        m = jnp.max(s, axis=-1, keepdims=True)
        p = jnp.exp(s - m)
        p = p * pl.reciprocal(jnp.sum(p, axis=-1, keepdims=True), approx=True)

        # Weighted values for all heads, then merge heads back to (TQ, C).
        o = jnp.einsum('hqk,hkd->hqd', p.astype(cdt), vh,
                       preferred_element_type=jnp.float32)          # (H, TQ, D)
        attn = o.transpose(1, 0, 2).reshape(TQ, C)

        # Output projection (att_drop / proj_drop are identity in eval mode).
        out = jnp.dot(attn.astype(cdt), wpT_ref[...],
                      preferred_element_type=jnp.float32) + bp_ref[...]
        out_ref[...] = out.astype(out_ref.dtype)

    return kernel


def masked_causal_attention(x, params, n_heads, *, compute_dtype=jnp.bfloat16):
    """Forward pass of MaskedCausalAttention with causal=True, no custom mask."""
    # TODO(synk): `set_custom_mask`/`index==0` branch not implemented (disabled by default).
    B, T, C = x.shape
    if C % n_heads != 0:
        raise ValueError(f"h_dim ({C}) must be divisible by n_heads ({n_heads})")
    D = C // n_heads

    # Query tiling bounds the O(T^2) score tensor; for small T it degenerates to one tile.
    # TODO(synk): for very long T also tile K/V flash-style (online softmax) instead of
    # holding full-length K/V projections per grid step.
    TQ = 128 if (T > 128 and T % 128 == 0) else T
    n_q = T // TQ

    kernel = _make_attention_kernel(n_heads, D, T, TQ)

    # bf16 operands for x and the weights (f32 accumulation in-kernel); biases stay f32.
    xc = x.astype(compute_dtype)
    wq = params["wqT"].astype(compute_dtype)
    wk = params["wkT"].astype(compute_dtype)
    wv = params["wvT"].astype(compute_dtype)
    wp = params["wpT"].astype(compute_dtype)
    bq = params["bq"].astype(jnp.float32)
    bk = params["bk"].astype(jnp.float32)
    bv = params["bv"].astype(jnp.float32)
    bp = params["bp"].astype(jnp.float32)

    def w_spec():
        return pl.BlockSpec((C, C), lambda b, qi: (0, 0))

    def b_spec():
        return pl.BlockSpec((1, C), lambda b, qi: (0, 0))

    # VMEM budget + advisory cost estimate.
    it = jnp.dtype(compute_dtype).itemsize
    f32 = 4
    w_bytes = 4 * C * C * it + 4 * C * f32
    blk_bytes = T * C * it + TQ * C * x.dtype.itemsize + w_bytes
    scratch_f32 = ((2 * T + TQ) * C + 2 * n_heads * TQ * T + n_heads * TQ * D + TQ * C) * f32
    vmem_limit = int(min(64 * 2**20, max(2 * blk_bytes + scratch_f32 + (2 << 20), 16 * 2**20)))

    flops = int(B * (8 * T * C * C + 4 * T * T * C))
    transcendentals = int(B * n_heads * T * T)
    bytes_accessed = int(B * T * C * (it + x.dtype.itemsize) + w_bytes)

    return pl.pallas_call(
        kernel,
        out_shape=jax.ShapeDtypeStruct((B, T, C), x.dtype),
        grid=(B, n_q),
        in_specs=[
            pl.BlockSpec((pl.Squeezed(), T, C), lambda b, qi: (b, 0, 0)),   # x
            w_spec(), b_spec(),                                             # q_net (W^T, b)
            w_spec(), b_spec(),                                             # k_net
            w_spec(), b_spec(),                                             # v_net
            w_spec(), b_spec(),                                             # proj_net
        ],
        out_specs=pl.BlockSpec((pl.Squeezed(), TQ, C), lambda b, qi: (b, qi, 0)),
        compiler_params=pltpu.CompilerParams(
            dimension_semantics=("parallel", "parallel"),
            vmem_limit_bytes=vmem_limit,
        ),
        cost_estimate=pl.CostEstimate(
            flops=flops, transcendentals=transcendentals, bytes_accessed=bytes_accessed),
    )(xc, wq, bq, wk, bk, wv, bv, wp, bp)


def _init_params(key, h_dim):
    """Deterministic nn.Linear-style init (uniform +-1/sqrt(in_features)), f32 master copy."""
    bound = 1.0 / math.sqrt(h_dim)
    keys = jax.random.split(key, 8)
    p = {}
    for i, name in enumerate(["q", "k", "v", "p"]):
        W = jax.random.uniform(keys[2 * i], (h_dim, h_dim), jnp.float32, -bound, bound)
        b = jax.random.uniform(keys[2 * i + 1], (h_dim,), jnp.float32, -bound, bound)
        p[f"w{name}T"] = W.T                       # pre-transpose so kernel does x @ W^T
        p[f"b{name}"] = b.reshape(1, h_dim)
    return p


def _reference(x, params, n_heads):
    """Pure-JAX f32 reference mirroring the PyTorch forward (eval mode, causal)."""
    B, T, C = x.shape
    D = C // n_heads
    q = x @ params["wqT"] + params["bq"]
    k = x @ params["wkT"] + params["bk"]
    v = x @ params["wvT"] + params["bv"]
    q = q.reshape(B, T, n_heads, D).transpose(0, 2, 1, 3)
    k = k.reshape(B, T, n_heads, D).transpose(0, 2, 1, 3)
    v = v.reshape(B, T, n_heads, D).transpose(0, 2, 1, 3)
    w = jnp.einsum("bntd,bnsd->bnts", q, k) / math.sqrt(D)
    mask = jnp.tril(jnp.ones((T, T), bool))
    w = jnp.where(mask, w, -jnp.inf)
    w = jax.nn.softmax(w, axis=-1)
    a = jnp.einsum("bnts,bnsd->bntd", w, v).transpose(0, 2, 1, 3).reshape(B, T, C)
    return a @ params["wpT"] + params["bp"]


if __name__ == "__main__":
    B, T, h_dim, n_heads = 2, 8, 32, 4   # max_T == T == 8
    key = jax.random.PRNGKey(0)
    kx, kp = jax.random.split(key)
    x = jax.random.normal(kx, (B, T, h_dim), jnp.float32)
    params = _init_params(kp, h_dim)

    out = masked_causal_attention(x, params, n_heads)
    out = jax.block_until_ready(out)

    ref = _reference(x, params, n_heads)
    assert out.shape == (B, T, h_dim)
    # bf16 matmul operands + approx reciprocal => compare with a bf16-scale tolerance.
    assert jnp.allclose(out, ref, atol=5e-2, rtol=5e-2), (
        f"mismatch vs reference (max abs err {jnp.max(jnp.abs(out - ref))})")
    print("KERNEL_OK")
</pallas_src>

<mosaic_0001>
module attributes {stable_mosaic.version = 11 : i64} {
  func.func @kernel(%arg0: i32, %arg1: i32, %arg2: memref<1x8x32xbf16, #tpu.memory_space<vmem>>, %arg3: memref<32x32xbf16, #tpu.memory_space<vmem>>, %arg4: memref<1x32xf32, #tpu.memory_space<vmem>>, %arg5: memref<32x32xbf16, #tpu.memory_space<vmem>>, %arg6: memref<1x32xf32, #tpu.memory_space<vmem>>, %arg7: memref<32x32xbf16, #tpu.memory_space<vmem>>, %arg8: memref<1x32xf32, #tpu.memory_space<vmem>>, %arg9: memref<32x32xbf16, #tpu.memory_space<vmem>>, %arg10: memref<1x32xf32, #tpu.memory_space<vmem>>, %arg11: memref<1x8x32xf32, #tpu.memory_space<vmem>>) attributes {dimension_semantics = [#tpu.dimension_semantics<parallel>, #tpu.dimension_semantics<parallel>], iteration_bounds = array<i64: 2, 1>, scalar_prefetch = 0 : i64, scratch_operands = 0 : i64, tpu.core_type = #tpu.core_type<tc>, window_params = [{transform_indices = @transform_0, window_bounds = array<i64: 1, 8, 32>}, {pipeline_mode = #tpu.pipeline_mode<synchronous>, transform_indices = @transform_1, window_bounds = array<i64: 32, 32>}, {pipeline_mode = #tpu.pipeline_mode<synchronous>, transform_indices = @transform_2, window_bounds = array<i64: 1, 32>}, {pipeline_mode = #tpu.pipeline_mode<synchronous>, transform_indices = @transform_3, window_bounds = array<i64: 32, 32>}, {pipeline_mode = #tpu.pipeline_mode<synchronous>, transform_indices = @transform_4, window_bounds = array<i64: 1, 32>}, {pipeline_mode = #tpu.pipeline_mode<synchronous>, transform_indices = @transform_5, window_bounds = array<i64: 32, 32>}, {pipeline_mode = #tpu.pipeline_mode<synchronous>, transform_indices = @transform_6, window_bounds = array<i64: 1, 32>}, {pipeline_mode = #tpu.pipeline_mode<synchronous>, transform_indices = @transform_7, window_bounds = array<i64: 32, 32>}, {pipeline_mode = #tpu.pipeline_mode<synchronous>, transform_indices = @transform_8, window_bounds = array<i64: 1, 32>}, {transform_indices = @transform_9, window_bounds = array<i64: 1, 8, 32>}]} {
    %c0 = arith.constant 0 : index
    %c0_0 = arith.constant 0 : index
    %c0_1 = arith.constant 0 : index
    %0 = vector.load %arg2[%c0, %c0_0, %c0_1] : memref<1x8x32xbf16, #tpu.memory_space<vmem>>, vector<1x8x32xbf16>
    %1 = vector.shape_cast %0 : vector<1x8x32xbf16> to vector<8x32xbf16>
    %c8_i32 = arith.constant 8 : i32
    %2 = arith.muli %arg1, %c8_i32 : i32
    %3 = tpu.assume_multiple %2, 8 : i32
    %c0_2 = arith.constant 0 : index
    %4 = arith.index_cast %3 : i32 to index
    %c0_3 = arith.constant 0 : index
    %5 = vector.load %arg2[%c0_2, %4, %c0_3] : memref<1x8x32xbf16, #tpu.memory_space<vmem>>, vector<1x8x32xbf16>
    %6 = vector.shape_cast %5 : vector<1x8x32xbf16> to vector<8x32xbf16>
    %c0_4 = arith.constant 0 : index
    %c0_5 = arith.constant 0 : index
    %7 = vector.load %arg3[%c0_4, %c0_5] : memref<32x32xbf16, #tpu.memory_space<vmem>>, vector<32x32xbf16>
    %cst = arith.constant dense<0.000000e+00> : vector<8x32xf32>
    %8 = tpu.matmul %6, %7, %cst {dimension_numbers = #tpu.dot_dimension_numbers<[1], [0], [0], [1], [0, 0, 1, 1], [], []>} : vector<8x32xbf16>, vector<32x32xbf16>, vector<8x32xf32> -> vector<8x32xf32>
    %c0_6 = arith.constant 0 : index
    %c0_7 = arith.constant 0 : index
    %9 = vector.load %arg4[%c0_6, %c0_7] : memref<1x32xf32, #tpu.memory_space<vmem>>, vector<1x32xf32>
    %10 = vector.broadcast %9 : vector<1x32xf32> to vector<8x32xf32>
    %11 = arith.addf %8, %10 : vector<8x32xf32>
    %c0_8 = arith.constant 0 : index
    %c0_9 = arith.constant 0 : index
    %12 = vector.load %arg5[%c0_8, %c0_9] : memref<32x32xbf16, #tpu.memory_space<vmem>>, vector<32x32xbf16>
    %cst_10 = arith.constant dense<0.000000e+00> : vector<8x32xf32>
    %13 = tpu.matmul %1, %12, %cst_10 {dimension_numbers = #tpu.dot_dimension_numbers<[1], [0], [0], [1], [0, 0, 1, 1], [], []>} : vector<8x32xbf16>, vector<32x32xbf16>, vector<8x32xf32> -> vector<8x32xf32>
    %c0_11 = arith.constant 0 : index
    %c0_12 = arith.constant 0 : index
    %14 = vector.load %arg6[%c0_11, %c0_12] : memref<1x32xf32, #tpu.memory_space<vmem>>, vector<1x32xf32>
    %15 = vector.broadcast %14 : vector<1x32xf32> to vector<8x32xf32>
    %16 = arith.addf %13, %15 : vector<8x32xf32>
    %c0_13 = arith.constant 0 : index
    %c0_14 = arith.constant 0 : index
    %17 = vector.load %arg7[%c0_13, %c0_14] : memref<32x32xbf16, #tpu.memory_space<vmem>>, vector<32x32xbf16>
    %cst_15 = arith.constant dense<0.000000e+00> : vector<8x32xf32>
    %18 = tpu.matmul %1, %17, %cst_15 {dimension_numbers = #tpu.dot_dimension_numbers<[1], [0], [0], [1], [0, 0, 1, 1], [], []>} : vector<8x32xbf16>, vector<32x32xbf16>, vector<8x32xf32> -> vector<8x32xf32>
    %c0_16 = arith.constant 0 : index
    %c0_17 = arith.constant 0 : index
    %19 = vector.load %arg8[%c0_16, %c0_17] : memref<1x32xf32, #tpu.memory_space<vmem>>, vector<1x32xf32>
    %20 = vector.broadcast %19 : vector<1x32xf32> to vector<8x32xf32>
    %21 = arith.addf %18, %20 : vector<8x32xf32>
    %cst_18 = arith.constant 0.353553385 : f32
    %22 = vector.broadcast %cst_18 : f32 to vector<8x32xf32>
    %23 = arith.mulf %11, %22 : vector<8x32xf32>
    %24 = vector.shape_cast %23 : vector<8x32xf32> to vector<8x4x8xf32>
    %25 = tpu.transpose %24, [1, 0, 2] : vector<8x4x8xf32> -> vector<4x8x8xf32>
    %26 = arith.truncf %25 : vector<4x8x8xf32> to vector<4x8x8xbf16>
    %27 = vector.shape_cast %16 : vector<8x32xf32> to vector<8x4x8xf32>
    %28 = tpu.transpose %27, [1, 0, 2] : vector<8x4x8xf32> -> vector<4x8x8xf32>
    %29 = arith.truncf %28 : vector<4x8x8xf32> to vector<4x8x8xbf16>
    %30 = vector.shape_cast %21 : vector<8x32xf32> to vector<8x4x8xf32>
    %31 = tpu.transpose %30, [1, 0, 2] : vector<8x4x8xf32> -> vector<4x8x8xf32>
    %32 = arith.truncf %31 : vector<4x8x8xf32> to vector<4x8x8xbf16>
    "tpu.trace_start"() <{level = 10 : i32, message = "hqd,hkd->hqk"}> : () -> ()
    %cst_19 = arith.constant dense<0.000000e+00> : vector<4x8x8xf32>
    %33 = tpu.matmul %26, %29, %cst_19 {dimension_numbers = #tpu.dot_dimension_numbers<[2], [2], [1], [1], [0, 0, 0, 1, 1, 1], [0], [0]>} : vector<4x8x8xbf16>, vector<4x8x8xbf16>, vector<4x8x8xf32> -> vector<4x8x8xf32>
    "tpu.trace_stop"() : () -> ()
    %c8_i32_20 = arith.constant 8 : i32
    %34 = arith.muli %arg1, %c8_i32_20 : i32
    %35 = tpu.iota {dimensions = array<i32: 0>} : vector<8x8xi32>
    %36 = vector.broadcast %34 : i32 to vector<8x8xi32>
    %37 = arith.addi %36, %35 : vector<8x8xi32>
    %38 = tpu.iota {dimensions = array<i32: 1>} : vector<8x8xi32>
    %39 = arith.cmpi sge, %37, %38 : vector<8x8xi32>
    %40 = vector.shape_cast %39 : vector<8x8xi1> to vector<1x8x8xi1>
    %cst_21 = arith.constant -3.40282347E+38 : f32
    %41 = vector.shape_cast %40 : vector<1x8x8xi1> to vector<1x8x8xi1>
    %42 = vector.broadcast %41 : vector<1x8x8xi1> to vector<4x8x8xi1>
    %43 = vector.broadcast %cst_21 : f32 to vector<4x8x8xf32>
    %44 = arith.select %42, %33, %43 : vector<4x8x8xi1>, vector<4x8x8xf32>
    %cst_22 = arith.constant dense<0xFF800000> : vector<4x8xf32>
    %45 = vector.multi_reduction <maximumf>, %44, %cst_22 [2] : vector<4x8x8xf32> to vector<4x8xf32>
    %46 = vector.shape_cast %45 : vector<4x8xf32> to vector<4x8x1xf32>
    %47 = vector.broadcast %46 : vector<4x8x1xf32> to vector<4x8x8xf32>
    %48 = arith.subf %44, %47 : vector<4x8x8xf32>
    %49 = math.exp %48 : vector<4x8x8xf32>
    %cst_23 = arith.constant dense<0.000000e+00> : vector<4x8xf32>
    %50 = vector.multi_reduction <add>, %49, %cst_23 [2] : vector<4x8x8xf32> to vector<4x8xf32>
    %51 = vector.shape_cast %50 : vector<4x8xf32> to vector<4x8x1xf32>
    %52 = tpu.reciprocal %51 {approx = true} : vector<4x8x1xf32> -> vector<4x8x1xf32>
    %53 = vector.broadcast %52 : vector<4x8x1xf32> to vector<4x8x8xf32>
    %54 = arith.mulf %49, %53 : vector<4x8x8xf32>
    %55 = arith.truncf %54 : vector<4x8x8xf32> to vector<4x8x8xbf16>
    "tpu.trace_start"() <{level = 10 : i32, message = "hqk,hkd->hqd"}> : () -> ()
    %cst_24 = arith.constant dense<0.000000e+00> : vector<4x8x8xf32>
    %56 = tpu.matmul %55, %32, %cst_24 {dimension_numbers = #tpu.dot_dimension_numbers<[2], [1], [1], [2], [0, 0, 0, 1, 1, 2], [0], [0]>} : vector<4x8x8xbf16>, vector<4x8x8xbf16>, vector<4x8x8xf32> -> vector<4x8x8xf32>
    "tpu.trace_stop"() : () -> ()
    %57 = tpu.transpose %56, [1, 0, 2] : vector<4x8x8xf32> -> vector<8x4x8xf32>
    %58 = vector.shape_cast %57 : vector<8x4x8xf32> to vector<8x32xf32>
    %59 = arith.truncf %58 : vector<8x32xf32> to vector<8x32xbf16>
    %c0_25 = arith.constant 0 : index
    %c0_26 = arith.constant 0 : index
    %60 = vector.load %arg9[%c0_25, %c0_26] : memref<32x32xbf16, #tpu.memory_space<vmem>>, vector<32x32xbf16>
    %cst_27 = arith.constant dense<0.000000e+00> : vector<8x32xf32>
    %61 = tpu.matmul %59, %60, %cst_27 {dimension_numbers = #tpu.dot_dimension_numbers<[1], [0], [0], [1], [0, 0, 1, 1], [], []>} : vector<8x32xbf16>, vector<32x32xbf16>, vector<8x32xf32> -> vector<8x32xf32>
    %c0_28 = arith.constant 0 : index
    %c0_29 = arith.constant 0 : index
    %62 = vector.load %arg10[%c0_28, %c0_29] : memref<1x32xf32, #tpu.memory_space<vmem>>, vector<1x32xf32>
    %63 = vector.broadcast %62 : vector<1x32xf32> to vector<8x32xf32>
    %64 = arith.addf %61, %63 : vector<8x32xf32>
    %c0_30 = arith.constant 0 : index
    %c0_31 = arith.constant 0 : index
    %c0_32 = arith.constant 0 : index
    %65 = vector.load %arg11[%c0_30, %c0_31, %c0_32] : memref<1x8x32xf32, #tpu.memory_space<vmem>>, vector<1x8x32xf32>
    %66 = vector.shape_cast %65 : vector<1x8x32xf32> to vector<8x32xf32>
    %67 = vector.shape_cast %64 : vector<8x32xf32> to vector<1x8x32xf32>
    tpu.vector_store %arg11[%c0_30, %c0_31, %c0_32], %67 {strides = array<i32>} : memref<1x8x32xf32, #tpu.memory_space<vmem>>, vector<1x8x32xf32>,
    return
  }
  func.func @transform_0(%arg0: i32, %arg1: i32) -> (i32, i32, i32) {
    %c0_i32 = arith.constant 0 : i32
    %c0_i32_0 = arith.constant 0 : i32
    %c0_i32_1 = arith.constant 0 : i32
    return %arg0, %c0_i32, %c0_i32_0 : i32, i32, i32
  }
  func.func @transform_1(%arg0: i32, %arg1: i32) -> (i32, i32) {
    %c0_i32 = arith.constant 0 : i32
    %c0_i32_0 = arith.constant 0 : i32
    %c0_i32_1 = arith.constant 0 : i32
    return %c0_i32, %c0_i32_0 : i32, i32
  }
  func.func @transform_2(%arg0: i32, %arg1: i32) -> (i32, i32) {
    %c0_i32 = arith.constant 0 : i32
    %c0_i32_0 = arith.constant 0 : i32
    %c0_i32_1 = arith.constant 0 : i32
    return %c0_i32, %c0_i32_0 : i32, i32
  }
  func.func @transform_3(%arg0: i32, %arg1: i32) -> (i32, i32) {
    %c0_i32 = arith.constant 0 : i32
    %c0_i32_0 = arith.constant 0 : i32
    %c0_i32_1 = arith.constant 0 : i32
    return %c0_i32, %c0_i32_0 : i32, i32
  }
  func.func @transform_4(%arg0: i32, %arg1: i32) -> (i32, i32) {
    %c0_i32 = arith.constant 0 : i32
    %c0_i32_0 = arith.constant 0 : i32
    %c0_i32_1 = arith.constant 0 : i32
    return %c0_i32, %c0_i32_0 : i32, i32
  }
  func.func @transform_5(%arg0: i32, %arg1: i32) -> (i32, i32) {
    %c0_i32 = arith.constant 0 : i32
    %c0_i32_0 = arith.constant 0 : i32
    %c0_i32_1 = arith.constant 0 : i32
    return %c0_i32, %c0_i32_0 : i32, i32
  }
  func.func @transform_6(%arg0: i32, %arg1: i32) -> (i32, i32) {
    %c0_i32 = arith.constant 0 : i32
    %c0_i32_0 = arith.constant 0 : i32
    %c0_i32_1 = arith.constant 0 : i32
    return %c0_i32, %c0_i32_0 : i32, i32
  }
  func.func @transform_7(%arg0: i32, %arg1: i32) -> (i32, i32) {
    %c0_i32 = arith.constant 0 : i32
    %c0_i32_0 = arith.constant 0 : i32
    %c0_i32_1 = arith.constant 0 : i32
    return %c0_i32, %c0_i32_0 : i32, i32
  }
  func.func @transform_8(%arg0: i32, %arg1: i32) -> (i32, i32) {
    %c0_i32 = arith.constant 0 : i32
    %c0_i32_0 = arith.constant 0 : i32
    %c0_i32_1 = arith.constant 0 : i32
    return %c0_i32, %c0_i32_0 : i32, i32
  }
  func.func @transform_9(%arg0: i32, %arg1: i32) -> (i32, i32, i32) {
    %c0_i32 = arith.constant 0 : i32
    %c0_i32_0 = arith.constant 0 : i32
    return %arg0, %arg1, %c0_i32 : i32, i32, i32
  }
}

</mosaic_0001>

<llo_original>
// kernel: tpu_custom_call.1
$region0: #{tpu_custom_call.1}
  #allocation0 [shape = 'u32[]', space=smem, size = 0x4, offset = 0x4, fixed_abs, tag = 'smem constant byte address 0x4 - core index']
  #allocation1 [shape = 'u32[72,128]{1,0:T(1,128)}', space=vmem, size = 0x9000, scoped, tag = 'internal scratch']
  %s0 = inlined_call_operand.hbm [shape: bf16[2,8,32], index: 0, kind: input, shape index: {}]
  %s1 = inlined_call_operand.hbm [shape: bf16[32,32], index: 1, kind: input, shape index: {}]
  %s2 = inlined_call_operand.vmem [shape: f32[1,32], index: 2, kind: input, shape index: {}]
  %s3 = inlined_call_operand.hbm [shape: bf16[32,32], index: 3, kind: input, shape index: {}]
  %s4 = inlined_call_operand.vmem [shape: f32[1,32], index: 4, kind: input, shape index: {}]
  %s5 = inlined_call_operand.hbm [shape: bf16[32,32], index: 5, kind: input, shape index: {}]
  %s6 = inlined_call_operand.vmem [shape: f32[1,32], index: 6, kind: input, shape index: {}]
  %s7 = inlined_call_operand.hbm [shape: bf16[32,32], index: 7, kind: input, shape index: {}]
  %s8 = inlined_call_operand.vmem [shape: f32[1,32], index: 8, kind: input, shape index: {}]
  %s9 = inlined_call_operand.hbm [shape: f32[2,8,32], index: 9, kind: output, shape index: {}]
  %s10 = sld [smem:[#allocation0]]
  $region89: #{tpu_custom_call.1} parent=0
    _
  %s12 = ssub.s32 1, %s10
  %s13 = scalar_select 0, %s12, %s10
  $region1: #{tpu_custom_call.1} parent=0
    #allocation2 [shape = 'u8[4096]{0}', space=vmem, size = 0x1000, scoped, tag = 'input window, operand 0']
    #allocation3 [shape = 's32[2]{0}', space=sflag, size = 0x8, scoped, tag = 'scoped memory for tpu_custom_call.1']
    #allocation4 [shape = 's32[2]{0}', space=sflag, size = 0x8, scoped, tag = 'scoped memory for tpu_custom_call.1']
    #allocation5 [shape = 'u8[8192]{0}', space=vmem, size = 0x2000, scoped, tag = 'input window, operand 1, single buffered']
    #allocation6 [shape = 's32[1]{0}', space=sflag, size = 0x4, scoped, tag = 'scoped memory for tpu_custom_call.1']
    #allocation7 [shape = 'u8[8192]{0}', space=vmem, size = 0x2000, scoped, tag = 'input window, operand 3, single buffered']
    #allocation8 [shape = 'u8[8192]{0}', space=vmem, size = 0x2000, scoped, tag = 'input window, operand 5, single buffered']
    #allocation9 [shape = 's32[1]{0}', space=sflag, size = 0x4, scoped, tag = 'scoped memory for tpu_custom_call.1']
    #allocation10 [shape = 'u8[8192]{0}', space=vmem, size = 0x2000, scoped, tag = 'input window, operand 7, single buffered']
    #allocation11 [shape = 'u8[8192]{0}', space=vmem, size = 0x2000, scoped, tag = 'output window, operand 0']
    %14 = vsyncpa [#allocation3], 0
    %s15 = scalar_lea.sflag [#allocation3], 1
    %16 = vsyncpa %s15, 0
    %17 = vsyncpa [#allocation6], 0
    %18 = vsyncpa [#allocation9], 0
    %19 = vsyncpa [#allocation4], 0
    %s20 = scalar_lea.sflag [#allocation4], 1
    %21 = vsyncpa %s20, 0
    loop: start=0, step=1, limit=4
    $region2: #{tpu_custom_call.1} parent=1 // loop_pre_header
      _
    $region3: #{tpu_custom_call.1} parent=1 // loop_header
      %s23 = sphi 0, %s27
      %p24 = scmp.ge.s32.totalorder %s23, 4
      %s30 = sphi 0, %s42
      %s31 = sphi 0, %s38
      %s32 = sphi 0, %s30
      %s33 = sphi 0, %s31
      %s34 = sphi 0, %s32
      %s35 = sphi 0, %s33
      %s45 = sphi 0, %s47
      %s48 = sphi 0, %s45
      %s49 = sphi 0, %s48
      %s65 = sphi 0, %s49
      %s69 = sphi 0, %s69
      %s71 = sphi 0, %s69
      %s72 = sphi 0, %s71
      %s86 = sphi 0, %s72
      %s90 = sphi 0, %s90
      %s92 = sphi 0, %s90
      %s93 = sphi 0, %s92
      %s107 = sphi 0, %s93
      %s111 = sphi 0, %s111
      %s113 = sphi 0, %s111
      %s114 = sphi 0, %s113
      %s128 = sphi 0, %s114
      %s132 = sphi 0, %s132
      %s134 = sphi 0, %s132
      %s135 = sphi 0, %s134
      %s149 = sphi 0, %s135
      %s153 = sphi 0, %s153
      %s155 = sphi 0, %s153
      %s156 = sphi 0, %s155
      %s170 = sphi 0, %s156
      %s174 = sphi 0, %s174
      %s176 = sphi 0, %s174
      %s177 = sphi 0, %s176
      %s191 = sphi 0, %s177
      %s195 = sphi 0, %s195
      %s197 = sphi 0, %s195
      %s198 = sphi 0, %s197
      %s212 = sphi 0, %s198
      %s216 = sphi 0, %s216
      %s218 = sphi 0, %s216
      %s219 = sphi 0, %s218
      %s233 = sphi 0, %s219
      %s241 = sphi 0, %s243
      %s244 = sphi 0, %s241
      %s245 = sphi 0, %s244
      %s261 = sphi 0, %s245
    $region4: #{tpu_custom_call.1} parent=1 // loop_header_branch
      %26 = sbr.rel (%p24) target = $region8
    $region5: #{tpu_custom_call.1} parent=1 // loop_body
      %s28 = ssub.s32 %s23, 1
      %s29 = ssub.s32 %s23, 2
      %s36 = sadd.s32 1, %s31
      %p37 = scmp.ge.s32.totalorder %s36, 1
      %s38 = scalar_select %p37, 0, %s36
      %s39 = sadd.s32 1, %s30
      %s40 = scalar_select %p37, %s39, %s30
      %p41 = scmp.ge.s32.totalorder %s40, 2
      %s42 = scalar_select %p41, 0, %s40
      %s43 = ssub.s32 %s30, %s42
      %p44 = scmp.eq.s32.totalorder %s43, 0
      %s46 = sadd.s32 %s45, 1
      %s47 = scalar_select %p44, %s45, %s46
      %p50 = pneg %p44
      %p51 = scmp.eq.s32.totalorder %s23, 1
      %p52 = por %p50, %p51
      %p53 = scmp.ne.s32.totalorder %s45, %s48
      %p54 = scmp.eq.s32.totalorder %s23, 0
      %p55 = por %p53, %p54
      %p56 = scmp.ne.s32.totalorder %s45, %s48
      %p57 = scmp.eq.s32.totalorder %s28, 1
      %p58 = por %p56, %p57
      %p59 = scmp.ne.s32.totalorder %s48, %s49
      %p60 = scmp.eq.s32.totalorder %s28, 0
      %p61 = por %p59, %p60
      %p62 = scmp.ne.s32.totalorder %s48, %s49
      %p63 = scmp.eq.s32.totalorder %s29, 1
      %p64 = por %p62, %p63
      %p66 = scmp.ne.s32.totalorder %s49, %s65
      %p67 = scmp.eq.s32.totalorder %s29, 0
      %p68 = por %p66, %p67
      %s70 = sadd.s32 %s69, 1
      %p73 = scmp.eq.s32.totalorder %s23, 1
      %p74 = scmp.ne.s32.totalorder %s69, %s71
      %p75 = scmp.eq.s32.totalorder %s23, 0
      %p76 = por %p74, %p75
      %p77 = scmp.ne.s32.totalorder %s69, %s71
      %p78 = scmp.eq.s32.totalorder %s28, 1
      %p79 = por %p77, %p78
      %p80 = scmp.ne.s32.totalorder %s71, %s72
      %p81 = scmp.eq.s32.totalorder %s28, 0
      %p82 = por %p80, %p81
      %p83 = scmp.ne.s32.totalorder %s71, %s72
      %p84 = scmp.eq.s32.totalorder %s29, 1
      %p85 = por %p83, %p84
      %p87 = scmp.ne.s32.totalorder %s72, %s86
      %p88 = scmp.eq.s32.totalorder %s29, 0
      %p89 = por %p87, %p88
      %s91 = sadd.s32 %s90, 1
      %p94 = scmp.eq.s32.totalorder %s23, 1
      %p95 = scmp.ne.s32.totalorder %s90, %s92
      %p96 = scmp.eq.s32.totalorder %s23, 0
      %p97 = por %p95, %p96
      %p98 = scmp.ne.s32.totalorder %s90, %s92
      %p99 = scmp.eq.s32.totalorder %s28, 1
      %p100 = por %p98, %p99
      %p101 = scmp.ne.s32.totalorder %s92, %s93
      %p102 = scmp.eq.s32.totalorder %s28, 0
      %p103 = por %p101, %p102
      %p104 = scmp.ne.s32.totalorder %s92, %s93
      %p105 = scmp.eq.s32.totalorder %s29, 1
      %p106 = por %p104, %p105
      %p108 = scmp.ne.s32.totalorder %s93, %s107
      %p109 = scmp.eq.s32.totalorder %s29, 0
      %p110 = por %p108, %p109
      %s112 = sadd.s32 %s111, 1
      %p115 = scmp.eq.s32.totalorder %s23, 1
      %p116 = scmp.ne.s32.totalorder %s111, %s113
      %p117 = scmp.eq.s32.totalorder %s23, 0
      %p118 = por %p116, %p117
      %p119 = scmp.ne.s32.totalorder %s111, %s113
      %p120 = scmp.eq.s32.totalorder %s28, 1
      %p121 = por %p119, %p120
      %p122 = scmp.ne.s32.totalorder %s113, %s114
      %p123 = scmp.eq.s32.totalorder %s28, 0
      %p124 = por %p122, %p123
      %p125 = scmp.ne.s32.totalorder %s113, %s114
      %p126 = scmp.eq.s32.totalorder %s29, 1
      %p127 = por %p125, %p126
      %p129 = scmp.ne.s32.totalorder %s114, %s128
      %p130 = scmp.eq.s32.totalorder %s29, 0
      %p131 = por %p129, %p130
      %s133 = sadd.s32 %s132, 1
      %p136 = scmp.eq.s32.totalorder %s23, 1
      %p137 = scmp.ne.s32.totalorder %s132, %s134
      %p138 = scmp.eq.s32.totalorder %s23, 0
      %p139 = por %p137, %p138
      %p140 = scmp.ne.s32.totalorder %s132, %s134
      %p141 = scmp.eq.s32.totalorder %s28, 1
      %p142 = por %p140, %p141
      %p143 = scmp.ne.s32.totalorder %s134, %s135
      %p144 = scmp.eq.s32.totalorder %s28, 0
      %p145 = por %p143, %p144
      %p146 = scmp.ne.s32.totalorder %s134, %s135
      %p147 = scmp.eq.s32.totalorder %s29, 1
      %p148 = por %p146, %p147
      %p150 = scmp.ne.s32.totalorder %s135, %s149
      %p151 = scmp.eq.s32.totalorder %s29, 0
      %p152 = por %p150, %p151
      %s154 = sadd.s32 %s153, 1
      %p157 = scmp.eq.s32.totalorder %s23, 1
      %p158 = scmp.ne.s32.totalorder %s153, %s155
      %p159 = scmp.eq.s32.totalorder %s23, 0
      %p160 = por %p158, %p159
      %p161 = scmp.ne.s32.totalorder %s153, %s155
      %p162 = scmp.eq.s32.totalorder %s28, 1
      %p163 = por %p161, %p162
      %p164 = scmp.ne.s32.totalorder %s155, %s156
      %p165 = scmp.eq.s32.totalorder %s28, 0
      %p166 = por %p164, %p165
      %p167 = scmp.ne.s32.totalorder %s155, %s156
      %p168 = scmp.eq.s32.totalorder %s29, 1
      %p169 = por %p167, %p168
      %p171 = scmp.ne.s32.totalorder %s156, %s170
      %p172 = scmp.eq.s32.totalorder %s29, 0
      %p173 = por %p171, %p172
      %s175 = sadd.s32 %s174, 1
      %p178 = scmp.eq.s32.totalorder %s23, 1
      %p179 = scmp.ne.s32.totalorder %s174, %s176
      %p180 = scmp.eq.s32.totalorder %s23, 0
      %p181 = por %p179, %p180
      %p182 = scmp.ne.s32.totalorder %s174, %s176
      %p183 = scmp.eq.s32.totalorder %s28, 1
      %p184 = por %p182, %p183
      %p185 = scmp.ne.s32.totalorder %s176, %s177
      %p186 = scmp.eq.s32.totalorder %s28, 0
      %p187 = por %p185, %p186
      %p188 = scmp.ne.s32.totalorder %s176, %s177
      %p189 = scmp.eq.s32.totalorder %s29, 1
      %p190 = por %p188, %p189
      %p192 = scmp.ne.s32.totalorder %s177, %s191
      %p193 = scmp.eq.s32.totalorder %s29, 0
      %p194 = por %p192, %p193
      %s196 = sadd.s32 %s195, 1
      %p199 = scmp.eq.s32.totalorder %s23, 1
      %p200 = scmp.ne.s32.totalorder %s195, %s197
      %p201 = scmp.eq.s32.totalorder %s23, 0
      %p202 = por %p200, %p201
      %p203 = scmp.ne.s32.totalorder %s195, %s197
      %p204 = scmp.eq.s32.totalorder %s28, 1
      %p205 = por %p203, %p204
      %p206 = scmp.ne.s32.totalorder %s197, %s198
      %p207 = scmp.eq.s32.totalorder %s28, 0
      %p208 = por %p206, %p207
      %p209 = scmp.ne.s32.totalorder %s197, %s198
      %p210 = scmp.eq.s32.totalorder %s29, 1
      %p211 = por %p209, %p210
      %p213 = scmp.ne.s32.totalorder %s198, %s212
      %p214 = scmp.eq.s32.totalorder %s29, 0
      %p215 = por %p213, %p214
      %s217 = sadd.s32 %s216, 1
      %p220 = scmp.eq.s32.totalorder %s23, 1
      %p221 = scmp.ne.s32.totalorder %s216, %s218
      %p222 = scmp.eq.s32.totalorder %s23, 0
      %p223 = por %p221, %p222
      %p224 = scmp.ne.s32.totalorder %s216, %s218
      %p225 = scmp.eq.s32.totalorder %s28, 1
      %p226 = por %p224, %p225
      %p227 = scmp.ne.s32.totalorder %s218, %s219
      %p228 = scmp.eq.s32.totalorder %s28, 0
      %p229 = por %p227, %p228
      %p230 = scmp.ne.s32.totalorder %s218, %s219
      %p231 = scmp.eq.s32.totalorder %s29, 1
      %p232 = por %p230, %p231
      %p234 = scmp.ne.s32.totalorder %s219, %s233
      %p235 = scmp.eq.s32.totalorder %s29, 0
      %p236 = por %p234, %p235
      %s237 = ssub.s32 %s30, %s42
      %s238 = ssub.s32 %s31, %s38
      %s239 = sor.u32 %s237, %s238
      %p240 = scmp.eq.s32.totalorder %s239, 0
      %s242 = sadd.s32 %s241, 1
      %s243 = scalar_select %p240, %s241, %s242
      %p246 = pneg %p240
      %p247 = scmp.eq.s32.totalorder %s23, 1
      %p248 = por %p246, %p247
      %p249 = scmp.ne.s32.totalorder %s241, %s244
      %p250 = scmp.eq.s32.totalorder %s23, 0
      %p251 = por %p249, %p250
      %p252 = scmp.ne.s32.totalorder %s241, %s244
      %p253 = scmp.eq.s32.totalorder %s28, 1
      %p254 = por %p252, %p253
      %p255 = scmp.ne.s32.totalorder %s244, %s245
      %p256 = scmp.eq.s32.totalorder %s28, 0
      %p257 = por %p255, %p256
      %p258 = scmp.ne.s32.totalorder %s244, %s245
      %p259 = scmp.eq.s32.totalorder %s29, 1
      %p260 = por %p258, %p259
      %p262 = scmp.ne.s32.totalorder %s245, %s261
      %p263 = scmp.eq.s32.totalorder %s29, 0
      %p264 = por %p262, %p263
      %p265 = scmp.le.s32.totalorder 1, %s23
      %p266 = scmp.lt.s32.totalorder %s23, 3
      %p267 = pnand %p265, %p266
      %p268 = pneg %p267
      // Predicated region
      $region9: #{tpu_custom_call.1} parent=5 // pred_check
        _
      $region10: #{tpu_custom_call.1} parent=5 // pred_check_branch
        %270 = sbr.rel (%p267) target = $region12
      $region11: #{tpu_custom_call.1} parent=5 // pred_region
        %s271 = ssub.s32 %s23, 1
        // Predicated region
        $region13: #{tpu_custom_call.1} parent=11 // pred_check
          %p272 = pneg %p82
        $region14: #{tpu_custom_call.1} parent=11 // pred_check_branch
          %274 = sbr.rel (%p272) target = $region16
        $region15: #{tpu_custom_call.1} parent=11 // pred_region
          %276 = vsyncadd [#allocation6], 0
          %s277 = sshll.u32 %s1, 4
          %s278 = int_to_ptr.hbm [resolvable:$true] %s277
          %s279 = sshll.u32 [#allocation5], 4
          %s280 = int_to_ptr.vmem [resolvable:$true] %s279
          %285 = dma.hbm_to_vmem [thread:$0]  %s278, 256, %s280, [#allocation6], 64, 64, 4
        $region16: #{tpu_custom_call.1} parent=11 // pred_fallthru
          _
        // Predicated region
        $region17: #{tpu_custom_call.1} parent=11 // pred_check
          %p286 = pneg %p103
        $region18: #{tpu_custom_call.1} parent=11 // pred_check_branch
          %288 = sbr.rel (%p286) target = $region20
        $region19: #{tpu_custom_call.1} parent=11 // pred_region
          _
        $region20: #{tpu_custom_call.1} parent=11 // pred_fallthru
          _
        // Predicated region
        $region21: #{tpu_custom_call.1} parent=11 // pred_check
          %p289 = pneg %p124
        $region22: #{tpu_custom_call.1} parent=11 // pred_check_branch
          %291 = sbr.rel (%p289) target = $region24
        $region23: #{tpu_custom_call.1} parent=11 // pred_region
          %293 = vsyncadd [#allocation6], 0
          %s294 = sshll.u32 %s3, 4
          %s295 = int_to_ptr.hbm [resolvable:$true] %s294
          %s296 = sshll.u32 [#allocation7], 4
          %s297 = int_to_ptr.vmem [resolvable:$true] %s296
          %302 = dma.hbm_to_vmem [thread:$0]  %s295, 256, %s297, [#allocation6], 64, 64, 4
        $region24: #{tpu_custom_call.1} parent=11 // pred_fallthru
          _
        // Predicated region
        $region25: #{tpu_custom_call.1} parent=11 // pred_check
          %p303 = pneg %p145
        $region26: #{tpu_custom_call.1} parent=11 // pred_check_branch
          %305 = sbr.rel (%p303) target = $region28
        $region27: #{tpu_custom_call.1} parent=11 // pred_region
          _
        $region28: #{tpu_custom_call.1} parent=11 // pred_fallthru
          _
        // Predicated region
        $region29: #{tpu_custom_call.1} parent=11 // pred_check
          %p306 = pneg %p166
        $region30: #{tpu_custom_call.1} parent=11 // pred_check_branch
          %308 = sbr.rel (%p306) target = $region32
        $region31: #{tpu_custom_call.1} parent=11 // pred_region
          %310 = vsyncadd [#allocation9], 0
          %s311 = sshll.u32 %s5, 4
          %s312 = int_to_ptr.hbm [resolvable:$true] %s311
          %s313 = sshll.u32 [#allocation8], 4
          %s314 = int_to_ptr.vmem [resolvable:$true] %s313
          %319 = dma.hbm_to_vmem [thread:$0]  %s312, 256, %s314, [#allocation9], 64, 64, 4
        $region32: #{tpu_custom_call.1} parent=11 // pred_fallthru
          _
        // Predicated region
        $region33: #{tpu_custom_call.1} parent=11 // pred_check
          %p320 = pneg %p187
        $region34: #{tpu_custom_call.1} parent=11 // pred_check_branch
          %322 = sbr.rel (%p320) target = $region36
        $region35: #{tpu_custom_call.1} parent=11 // pred_region
          _
        $region36: #{tpu_custom_call.1} parent=11 // pred_fallthru
          _
        // Predicated region
        $region37: #{tpu_custom_call.1} parent=11 // pred_check
          %p323 = pneg %p208
        $region38: #{tpu_custom_call.1} parent=11 // pred_check_branch
          %325 = sbr.rel (%p323) target = $region40
        $region39: #{tpu_custom_call.1} parent=11 // pred_region
          %327 = vsyncadd [#allocation9], 0
          %s328 = sshll.u32 %s7, 4
          %s329 = int_to_ptr.hbm [resolvable:$true] %s328
          %s330 = sshll.u32 [#allocation10], 4
          %s331 = int_to_ptr.vmem [resolvable:$true] %s330
          %336 = dma.hbm_to_vmem [thread:$0]  %s329, 256, %s331, [#allocation9], 64, 64, 4
        $region40: #{tpu_custom_call.1} parent=11 // pred_fallthru
          _
        // Predicated region
        $region41: #{tpu_custom_call.1} parent=11 // pred_check
          %p337 = pneg %p229
        $region42: #{tpu_custom_call.1} parent=11 // pred_check_branch
          %339 = sbr.rel (%p337) target = $region44
        $region43: #{tpu_custom_call.1} parent=11 // pred_region
          _
        $region44: #{tpu_custom_call.1} parent=11 // pred_fallthru
          _
      $region12: #{tpu_custom_call.1} parent=5 // pred_fallthru
        _
      %p340 = scmp.lt.s32.totalorder %s23, 2
      // Predicated region
      $region45: #{tpu_custom_call.1} parent=5 // pred_check
        %p341 = pneg %p340
      $region46: #{tpu_custom_call.1} parent=5 // pred_check_branch
        %343 = sbr.rel (%p341) target = $region48
      $region47: #{tpu_custom_call.1} parent=5 // pred_region
        // Predicated region
        $region49: #{tpu_custom_call.1} parent=47 // pred_check
          %p344 = pneg %p55
        $region50: #{tpu_custom_call.1} parent=47 // pred_check_branch
          %346 = sbr.rel (%p344) target = $region52
        $region51: #{tpu_custom_call.1} parent=47 // pred_region
          %s347 = sand.u32 %s45, 1
          %s348 = scalar_lea.sflag [#allocation3], %s347
          %s349 = sand.u32 %s45, 1
          %s350 = smul.addr %s349, 4
          %s351 = scalar_lea.vmem [#allocation2], %s350
          %353 = vsyncadd %s348, 0
          %s354 = smul.addr %s30, 4
          %s355 = scalar_lea.hbm %s0, %s354
          %s357 = sshll.u32 %s355, 4
          %s358 = int_to_ptr.hbm [resolvable:$true] %s357
          %s359 = sshll.u32 %s351, 4
          %s360 = int_to_ptr.vmem [resolvable:$true] %s359
          %362 = dma.hbm_to_vmem [thread:$0]  %s358, 64, %s360, %s348
        $region52: #{tpu_custom_call.1} parent=47 // pred_fallthru
          _
      $region48: #{tpu_custom_call.1} parent=5 // pred_fallthru
        _
      %p363 = scmp.le.s32.totalorder 1, %s23
      %p364 = scmp.lt.s32.totalorder %s23, 3
      %p365 = pnand %p363, %p364
      %p366 = pneg %p365
      // Predicated region
      $region53: #{tpu_custom_call.1} parent=5 // pred_check
        _
      $region54: #{tpu_custom_call.1} parent=5 // pred_check_branch
        %368 = sbr.rel (%p365) target = $region56
      $region55: #{tpu_custom_call.1} parent=5 // pred_region
        %s369 = ssub.s32 %s23, 1
        %s370 = sand.u32 %s48, 1
        %s371 = scalar_lea.sflag [#allocation3], %s370
        %s372 = sand.u32 %s48, 1
        %s373 = smul.addr %s372, 4
        %s374 = scalar_lea.vmem [#allocation2], %s373
        // Predicated region
        $region57: #{tpu_custom_call.1} parent=55 // pred_check
          %p375 = pneg %p61
        $region58: #{tpu_custom_call.1} parent=55 // pred_check_branch
          %377 = sbr.rel (%p375) target = $region60
        $region59: #{tpu_custom_call.1} parent=55 // pred_region
          %379 = dma.done %s371, 64
        $region60: #{tpu_custom_call.1} parent=55 // pred_fallthru
          _
        // Predicated region
        $region61: #{tpu_custom_call.1} parent=55 // pred_check
          %p380 = pneg %p82
        $region62: #{tpu_custom_call.1} parent=55 // pred_check_branch
          %382 = sbr.rel (%p380) target = $region64
        $region63: #{tpu_custom_call.1} parent=55 // pred_region
          %384 = dma.done [#allocation6], 256
        $region64: #{tpu_custom_call.1} parent=55 // pred_fallthru
          _
        // Predicated region
        $region65: #{tpu_custom_call.1} parent=55 // pred_check
          %p385 = pneg %p124
        $region66: #{tpu_custom_call.1} parent=55 // pred_check_branch
          %387 = sbr.rel (%p385) target = $region68
        $region67: #{tpu_custom_call.1} parent=55 // pred_region
          %389 = dma.done [#allocation6], 256
        $region68: #{tpu_custom_call.1} parent=55 // pred_fallthru
          _
        // Predicated region
        $region69: #{tpu_custom_call.1} parent=55 // pred_check
          %p390 = pneg %p166
        $region70: #{tpu_custom_call.1} parent=55 // pred_check_branch
          %392 = sbr.rel (%p390) target = $region72
        $region71: #{tpu_custom_call.1} parent=55 // pred_region
          %394 = dma.done [#allocation9], 256
        $region72: #{tpu_custom_call.1} parent=55 // pred_fallthru
          _
        // Predicated region
        $region73: #{tpu_custom_call.1} parent=55 // pred_check
          %p395 = pneg %p208
        $region74: #{tpu_custom_call.1} parent=55 // pred_check_branch
          %397 = sbr.rel (%p395) target = $region76
        $region75: #{tpu_custom_call.1} parent=55 // pred_region
          %399 = dma.done [#allocation9], 256
        $region76: #{tpu_custom_call.1} parent=55 // pred_fallthru
          _
        %s400 = sand.u32 %s48, 1
        %s401 = scalar_lea.sflag [#allocation3], %s400
        %s402 = sand.u32 %s48, 1
        %s403 = smul.addr %s402, 4
        %s404 = scalar_lea.vmem [#allocation2], %s403
        %p405 = pneg %p61
        %p406 = pneg %p58
        %p407 = pneg %p82
        %p408 = pneg %p79
        %p409 = pneg %p103
        %p410 = pneg %p100
        %p411 = pneg %p124
        %p412 = pneg %p121
        %p413 = pneg %p145
        %p414 = pneg %p142
        %p415 = pneg %p166
        %p416 = pneg %p163
        %p417 = pneg %p187
        %p418 = pneg %p184
        %p419 = pneg %p208
        %p420 = pneg %p205
        %p421 = pneg %p229
        %p422 = pneg %p226
        %p423 = pneg %p257
        %p424 = pneg %p254
        %s425 = sand.u32 %s244, 1
        %s426 = scalar_lea.sflag [#allocation4], %s425
        %s427 = sand.u32 %s244, 1
        %s428 = smul.addr %s427, 8
        %s429 = scalar_lea.vmem [#allocation11], %s428
        %v431 = vld [vmem:[%s374] sm:$0xf]
        %s432 = smul.u32 %s33, 8
        %s433 = sshra.s32 %s432, 3
        %s434 = sand.u32 %s432, 7
        %s435 = smul.addr %s433, 4
        %s436 = scalar_lea.vmem %s374, %s435 [#allocation2]
        %v437 = vld [vmem:[%s436] sm:$0xf]
        %v438 = vld [vmem:[#allocation5] sm:$0xf]
        %v439 = vld [vmem:[#allocation5 + $0x4] sm:$0xf]
        %v440 = vld [vmem:[#allocation5 + $0x8] sm:$0xf]
        %v441 = vld [vmem:[#allocation5 + $0xc] sm:$0xf]
        %v442 = vld [vmem:[%s2] sm:$0x1]
        %v444 = vperm.slane %v442, 0
        %v450 = vunpack.c.l.b16 %v438
        %v451 = vunpack.c.l.b16 %v439
        %v452 = vunpack.c.l.b16 %v440
        %v453 = vunpack.c.l.b16 %v441
        %v454 = vpack.c.b16 %v451, %v450
        %v455 = vpack.c.b16 %v453, %v452
        %vm458 = vcmask 261120
        %v460 = vsel %vm458, %v437, 0
        %462 = vmatpush.bf16.msra.mxu0 0
        %463 = vmatpush.bf16.msra.mxu0 0
        %464 = vmatpush.bf16.msra.mxu0 0
        %465 = vmatpush.bf16.msra.mxu0 0
        %466 = vmatpush.bf16.msra.mxu0 0
        %467 = vmatpush.bf16.msra.mxu0 0
        %468 = vmatpush.bf16.msra.mxu0 %v455
        %469 = vmatpush.bf16.msra.mxu0 %v454
        %470 = vmatmul.bf16.gmra.mxu0 %v460
        %v471 = vpop.f32.mrf.mxu0
        %v472 = vadd.f32 %v444, %v471
        %v473 = vpop.f32.mrf.mxu0
        %474 = vdwg.mxu0
        %v475 = vld [vmem:[#allocation7] sm:$0xf]
        %v476 = vld [vmem:[#allocation7 + $0x4] sm:$0xf]
        %v477 = vld [vmem:[#allocation7 + $0x8] sm:$0xf]
        %v478 = vld [vmem:[#allocation7 + $0xc] sm:$0xf]
        %v479 = vld [vmem:[%s4] sm:$0x1]
        %v481 = vperm.slane %v479, 0
        %v487 = vunpack.c.l.b16 %v475
        %v488 = vunpack.c.l.b16 %v476
        %v489 = vunpack.c.l.b16 %v477
        %v490 = vunpack.c.l.b16 %v478
        %v491 = vpack.c.b16 %v488, %v487
        %v492 = vpack.c.b16 %v490, %v489
        %v496 = vsel %vm458, %v431, 0
        %498 = vmatpush.bf16.msra.mxu0 0
        %499 = vmatpush.bf16.msra.mxu0 0
        %500 = vmatpush.bf16.msra.mxu0 0
        %501 = vmatpush.bf16.msra.mxu0 0
        %502 = vmatpush.bf16.msra.mxu0 0
        %503 = vmatpush.bf16.msra.mxu0 0
        %504 = vmatpush.bf16.msra.mxu0 %v492
        %505 = vmatpush.bf16.msra.mxu0 %v491
        %506 = vmatmul.bf16.gmra.mxu0 %v496
        %v507 = vpop.f32.mrf.mxu0
        %v508 = vadd.f32 %v481, %v507
        %v509 = vpop.f32.mrf.mxu0
        %510 = vdwg.mxu0
        %v511 = vld [vmem:[#allocation8] sm:$0xf]
        %v512 = vld [vmem:[#allocation8 + $0x4] sm:$0xf]
        %v513 = vld [vmem:[#allocation8 + $0x8] sm:$0xf]
        %v514 = vld [vmem:[#allocation8 + $0xc] sm:$0xf]
        %v515 = vld [vmem:[%s6] sm:$0x1]
        %v517 = vperm.slane %v515, 0
        %v523 = vunpack.c.l.b16 %v511
        %v524 = vunpack.c.l.b16 %v512
        %v525 = vunpack.c.l.b16 %v513
        %v526 = vunpack.c.l.b16 %v514
        %v527 = vpack.c.b16 %v524, %v523
        %v528 = vpack.c.b16 %v526, %v525
        %531 = vmatpush.bf16.msra.mxu0 0
        %532 = vmatpush.bf16.msra.mxu0 0
        %533 = vmatpush.bf16.msra.mxu0 0
        %534 = vmatpush.bf16.msra.mxu0 0
        %535 = vmatpush.bf16.msra.mxu0 0
        %536 = vmatpush.bf16.msra.mxu0 0
        %537 = vmatpush.bf16.msra.mxu0 %v528
        %538 = vmatpush.bf16.msra.mxu0 %v527
        %539 = vmatmul.bf16.gmra.mxu0 %v496
        %v540 = vpop.f32.mrf.mxu0
        %v541 = vadd.f32 %v517, %v540
        %v542 = vpop.f32.mrf.mxu0
        %543 = vdwg.mxu0
        %v544 = vmul.f32 %v472, 0.35355338
        %546 = vrot.lane.b32.xlu0 %v544, 120
        %v547 = vpop.permute.xlu0 %546
        %549 = vrot.lane.b32.xlu0 %v544, 112
        %v550 = vpop.permute.xlu0 %549
        %552 = vrot.lane.b32.xlu0 %v544, 104
        %v553 = vpop.permute.xlu0 %552
        %v555 = vrot.slane %v550, 4
        %vm556 = vcmask 1047556
        %v557 = vsel %vm556, %v555, %v544
        %v558 = vrot.slane %v544, 4
        %v559 = vsel %vm556, %v550, %v558
        %v561 = vunpack.c.l.s4 1983009808
        %v562 = vunpack.c.0.s8 %v561
        %v563 = vperm.slane %v557, %v562
        %v565 = vunpack.c.l.s4 1983009808
        %v566 = vunpack.c.0.s8 %v565
        %v567 = vperm.slane %v559, %v566
        %v568 = vrot.slane %v553, 4
        %v569 = vsel %vm556, %v568, %v547
        %v570 = vrot.slane %v547, 4
        %v571 = vsel %vm556, %v553, %v570
        %v573 = vunpack.c.l.s4 1983009808
        %v574 = vunpack.c.0.s8 %v573
        %v575 = vperm.slane %v569, %v574
        %v577 = vunpack.c.l.s4 1983009808
        %v578 = vunpack.c.0.s8 %v577
        %v579 = vperm.slane %v571, %v578
        %v580 = vrot.slane %v575, 4
        %v581 = vsel %vm556, %v580, %v563
        %v582 = vrot.slane %v563, 4
        %v583 = vsel %vm556, %v575, %v582
        %v585 = vunpack.c.l.s4 1934713408
        %v586 = vunpack.c.0.s8 %v585
        %v587 = vperm.slane %v581, %v586
        %v589 = vunpack.c.l.s4 1934713408
        %v590 = vunpack.c.0.s8 %v589
        %v591 = vperm.slane %v583, %v590
        %v592 = vrot.slane %v579, 4
        %v593 = vsel %vm556, %v592, %v567
        %v594 = vrot.slane %v567, 4
        %v595 = vsel %vm556, %v579, %v594
        %v597 = vunpack.c.l.s4 1934713408
        %v598 = vunpack.c.0.s8 %v597
        %v599 = vperm.slane %v593, %v598
        %v601 = vunpack.c.l.s4 1934713408
        %v602 = vunpack.c.0.s8 %v601
        %v603 = vperm.slane %v595, %v602
        %v604 = vrot.slane %v587, 4
        %v605 = vsel %vm556, 0.0, %v604
        %v606 = vrot.slane %v591, 4
        %v607 = vsel %vm556, 0.0, %v606
        %v608 = vrot.slane %v599, 4
        %v609 = vsel %vm556, 0.0, %v608
        %v610 = vrot.slane %v603, 4
        %v611 = vsel %vm556, 0.0, %v610
        %v612 = vsel %vm556, %v606, %v587
        %v614 = vunpack.c.l.s4 1983009808
        %v615 = vunpack.c.0.s8 %v614
        %v616 = vperm.slane %v612, %v615
        %v617 = vrot.slane %v607, 4
        %v618 = vsel %vm556, %v617, %v605
        %v620 = vunpack.c.l.s4 1983009808
        %v621 = vunpack.c.0.s8 %v620
        %v622 = vperm.slane %v618, %v621
        %v623 = vsel %vm556, %v610, %v599
        %v625 = vunpack.c.l.s4 1983009808
        %v626 = vunpack.c.0.s8 %v625
        %v627 = vperm.slane %v623, %v626
        %v628 = vrot.slane %v611, 4
        %v629 = vsel %vm556, %v628, %v609
        %v631 = vunpack.c.l.s4 1983009808
        %v632 = vunpack.c.0.s8 %v631
        %v633 = vperm.slane %v629, %v632
        %v634 = vrot.slane %v622, 4
        %v635 = vsel %vm556, %v634, %v616
        %v636 = vrot.slane %v616, 4
        %v637 = vsel %vm556, %v622, %v636
        %v639 = vunpack.c.l.s4 1934713408
        %v640 = vunpack.c.0.s8 %v639
        %v641 = vperm.slane %v635, %v640
        %v643 = vunpack.c.l.s4 1934713408
        %v644 = vunpack.c.0.s8 %v643
        %v645 = vperm.slane %v637, %v644
        %v646 = vrot.slane %v633, 4
        %v647 = vsel %vm556, %v646, %v627
        %v648 = vrot.slane %v627, 4
        %v649 = vsel %vm556, %v633, %v648
        %v651 = vunpack.c.l.s4 1934713408
        %v652 = vunpack.c.0.s8 %v651
        %v653 = vperm.slane %v647, %v652
        %v655 = vunpack.c.l.s4 1934713408
        %v656 = vunpack.c.0.s8 %v655
        %v657 = vperm.slane %v649, %v656
        %v658 = vrot.slane %v653, 4
        %v659 = vsel %vm556, %v658, %v641
        %v660 = vrot.slane %v641, 4
        %v661 = vsel %vm556, %v653, %v660
        %v662 = vrot.slane %v657, 4
        %v663 = vsel %vm556, %v662, %v645
        %v664 = vrot.slane %v645, 4
        %v665 = vsel %vm556, %v657, %v664
        %v666 = vpack.c.bf16 %v659, %v659
        %v667 = vpack.c.bf16 %v661, %v661
        %v668 = vpack.c.bf16 %v663, %v663
        %v669 = vpack.c.bf16 %v665, %v665
        %671 = vrot.lane.b32.xlu0 %v508, 120
        %v672 = vpop.permute.xlu0 %671
        %674 = vrot.lane.b32.xlu0 %v508, 112
        %v675 = vpop.permute.xlu0 %674
        %677 = vrot.lane.b32.xlu0 %v508, 104
        %v678 = vpop.permute.xlu0 %677
        %v680 = vrot.slane %v675, 4
        %v681 = vsel %vm556, %v680, %v508
        %v682 = vrot.slane %v508, 4
        %v683 = vsel %vm556, %v675, %v682
        %v685 = vunpack.c.l.s4 1983009808
        %v686 = vunpack.c.0.s8 %v685
        %v687 = vperm.slane %v681, %v686
        %v689 = vunpack.c.l.s4 1983009808
        %v690 = vunpack.c.0.s8 %v689
        %v691 = vperm.slane %v683, %v690
        %v692 = vrot.slane %v678, 4
        %v693 = vsel %vm556, %v692, %v672
        %v694 = vrot.slane %v672, 4
        %v695 = vsel %vm556, %v678, %v694
        %v697 = vunpack.c.l.s4 1983009808
        %v698 = vunpack.c.0.s8 %v697
        %v699 = vperm.slane %v693, %v698
        %v701 = vunpack.c.l.s4 1983009808
        %v702 = vunpack.c.0.s8 %v701
        %v703 = vperm.slane %v695, %v702
        %v704 = vrot.slane %v699, 4
        %v705 = vsel %vm556, %v704, %v687
        %v706 = vrot.slane %v687, 4
        %v707 = vsel %vm556, %v699, %v706
        %v709 = vunpack.c.l.s4 1934713408
        %v710 = vunpack.c.0.s8 %v709
        %v711 = vperm.slane %v705, %v710
        %v713 = vunpack.c.l.s4 1934713408
        %v714 = vunpack.c.0.s8 %v713
        %v715 = vperm.slane %v707, %v714
        %v716 = vrot.slane %v703, 4
        %v717 = vsel %vm556, %v716, %v691
        %v718 = vrot.slane %v691, 4
        %v719 = vsel %vm556, %v703, %v718
        %v721 = vunpack.c.l.s4 1934713408
        %v722 = vunpack.c.0.s8 %v721
        %v723 = vperm.slane %v717, %v722
        %v725 = vunpack.c.l.s4 1934713408
        %v726 = vunpack.c.0.s8 %v725
        %v727 = vperm.slane %v719, %v726
        %v728 = vrot.slane %v711, 4
        %v729 = vsel %vm556, 0.0, %v728
        %v730 = vrot.slane %v715, 4
        %v731 = vsel %vm556, 0.0, %v730
        %v732 = vrot.slane %v723, 4
        %v733 = vsel %vm556, 0.0, %v732
        %v734 = vrot.slane %v727, 4
        %v735 = vsel %vm556, 0.0, %v734
        %v736 = vsel %vm556, %v730, %v711
        %v738 = vunpack.c.l.s4 1983009808
        %v739 = vunpack.c.0.s8 %v738
        %v740 = vperm.slane %v736, %v739
        %v741 = vrot.slane %v731, 4
        %v742 = vsel %vm556, %v741, %v729
        %v744 = vunpack.c.l.s4 1983009808
        %v745 = vunpack.c.0.s8 %v744
        %v746 = vperm.slane %v742, %v745
        %v747 = vsel %vm556, %v734, %v723
        %v749 = vunpack.c.l.s4 1983009808
        %v750 = vunpack.c.0.s8 %v749
        %v751 = vperm.slane %v747, %v750
        %v752 = vrot.slane %v735, 4
        %v753 = vsel %vm556, %v752, %v733
        %v755 = vunpack.c.l.s4 1983009808
        %v756 = vunpack.c.0.s8 %v755
        %v757 = vperm.slane %v753, %v756
        %v758 = vrot.slane %v746, 4
        %v759 = vsel %vm556, %v758, %v740
        %v760 = vrot.slane %v740, 4
        %v761 = vsel %vm556, %v746, %v760
        %v763 = vunpack.c.l.s4 1934713408
        %v764 = vunpack.c.0.s8 %v763
        %v765 = vperm.slane %v759, %v764
        %v767 = vunpack.c.l.s4 1934713408
        %v768 = vunpack.c.0.s8 %v767
        %v769 = vperm.slane %v761, %v768
        %v770 = vrot.slane %v757, 4
        %v771 = vsel %vm556, %v770, %v751
        %v772 = vrot.slane %v751, 4
        %v773 = vsel %vm556, %v757, %v772
        %v775 = vunpack.c.l.s4 1934713408
        %v776 = vunpack.c.0.s8 %v775
        %v777 = vperm.slane %v771, %v776
        %v779 = vunpack.c.l.s4 1934713408
        %v780 = vunpack.c.0.s8 %v779
        %v781 = vperm.slane %v773, %v780
        %v782 = vrot.slane %v777, 4
        %v783 = vsel %vm556, %v782, %v765
        %v784 = vrot.slane %v765, 4
        %v785 = vsel %vm556, %v777, %v784
        %v786 = vrot.slane %v781, 4
        %v787 = vsel %vm556, %v786, %v769
        %v788 = vrot.slane %v769, 4
        %v789 = vsel %vm556, %v781, %v788
        %v790 = vpack.c.bf16 %v783, %v783
        %v791 = vpack.c.bf16 %v785, %v785
        %v792 = vpack.c.bf16 %v787, %v787
        %v793 = vpack.c.bf16 %v789, %v789
        %795 = vrot.lane.b32.xlu0 %v541, 120
        %v796 = vpop.permute.xlu0 %795
        %798 = vrot.lane.b32.xlu0 %v541, 112
        %v799 = vpop.permute.xlu0 %798
        %801 = vrot.lane.b32.xlu0 %v541, 104
        %v802 = vpop.permute.xlu0 %801
        %v804 = vrot.slane %v799, 4
        %v805 = vsel %vm556, %v804, %v541
        %v806 = vrot.slane %v541, 4
        %v807 = vsel %vm556, %v799, %v806
        %v809 = vunpack.c.l.s4 1983009808
        %v810 = vunpack.c.0.s8 %v809
        %v811 = vperm.slane %v805, %v810
        %v813 = vunpack.c.l.s4 1983009808
        %v814 = vunpack.c.0.s8 %v813
        %v815 = vperm.slane %v807, %v814
        %v816 = vrot.slane %v802, 4
        %v817 = vsel %vm556, %v816, %v796
        %v818 = vrot.slane %v796, 4
        %v819 = vsel %vm556, %v802, %v818
        %v821 = vunpack.c.l.s4 1983009808
        %v822 = vunpack.c.0.s8 %v821
        %v823 = vperm.slane %v817, %v822
        %v825 = vunpack.c.l.s4 1983009808
        %v826 = vunpack.c.0.s8 %v825
        %v827 = vperm.slane %v819, %v826
        %v828 = vrot.slane %v823, 4
        %v829 = vsel %vm556, %v828, %v811
        %v830 = vrot.slane %v811, 4
        %v831 = vsel %vm556, %v823, %v830
        %v833 = vunpack.c.l.s4 1934713408
        %v834 = vunpack.c.0.s8 %v833
        %v835 = vperm.slane %v829, %v834
        %v837 = vunpack.c.l.s4 1934713408
        %v838 = vunpack.c.0.s8 %v837
        %v839 = vperm.slane %v831, %v838
        %v840 = vrot.slane %v827, 4
        %v841 = vsel %vm556, %v840, %v815
        %v842 = vrot.slane %v815, 4
        %v843 = vsel %vm556, %v827, %v842
        %v845 = vunpack.c.l.s4 1934713408
        %v846 = vunpack.c.0.s8 %v845
        %v847 = vperm.slane %v841, %v846
        %v849 = vunpack.c.l.s4 1934713408
        %v850 = vunpack.c.0.s8 %v849
        %v851 = vperm.slane %v843, %v850
        %v852 = vrot.slane %v835, 4
        %v853 = vsel %vm556, 0.0, %v852
        %v854 = vrot.slane %v839, 4
        %v855 = vsel %vm556, 0.0, %v854
        %v856 = vrot.slane %v847, 4
        %v857 = vsel %vm556, 0.0, %v856
        %v858 = vrot.slane %v851, 4
        %v859 = vsel %vm556, 0.0, %v858
        %v860 = vsel %vm556, %v854, %v835
        %v862 = vunpack.c.l.s4 1983009808
        %v863 = vunpack.c.0.s8 %v862
        %v864 = vperm.slane %v860, %v863
        %v865 = vrot.slane %v855, 4
        %v866 = vsel %vm556, %v865, %v853
        %v868 = vunpack.c.l.s4 1983009808
        %v869 = vunpack.c.0.s8 %v868
        %v870 = vperm.slane %v866, %v869
        %v871 = vsel %vm556, %v858, %v847
        %v873 = vunpack.c.l.s4 1983009808
        %v874 = vunpack.c.0.s8 %v873
        %v875 = vperm.slane %v871, %v874
        %v876 = vrot.slane %v859, 4
        %v877 = vsel %vm556, %v876, %v857
        %v879 = vunpack.c.l.s4 1983009808
        %v880 = vunpack.c.0.s8 %v879
        %v881 = vperm.slane %v877, %v880
        %v882 = vrot.slane %v870, 4
        %v883 = vsel %vm556, %v882, %v864
        %v884 = vrot.slane %v864, 4
        %v885 = vsel %vm556, %v870, %v884
        %v887 = vunpack.c.l.s4 1934713408
        %v888 = vunpack.c.0.s8 %v887
        %v889 = vperm.slane %v883, %v888
        %v891 = vunpack.c.l.s4 1934713408
        %v892 = vunpack.c.0.s8 %v891
        %v893 = vperm.slane %v885, %v892
        %v894 = vrot.slane %v881, 4
        %v895 = vsel %vm556, %v894, %v875
        %v896 = vrot.slane %v875, 4
        %v897 = vsel %vm556, %v881, %v896
        %v899 = vunpack.c.l.s4 1934713408
        %v900 = vunpack.c.0.s8 %v899
        %v901 = vperm.slane %v895, %v900
        %v903 = vunpack.c.l.s4 1934713408
        %v904 = vunpack.c.0.s8 %v903
        %v905 = vperm.slane %v897, %v904
        %v906 = vrot.slane %v901, 4
        %v907 = vsel %vm556, %v906, %v889
        %v908 = vrot.slane %v889, 4
        %v909 = vsel %vm556, %v901, %v908
        %v910 = vrot.slane %v905, 4
        %v911 = vsel %vm556, %v910, %v893
        %v912 = vrot.slane %v893, 4
        %v913 = vsel %vm556, %v905, %v912
        %v914 = vpack.c.bf16 %v907, %v907
        %v915 = vpack.c.bf16 %v909, %v909
        %v916 = vpack.c.bf16 %v911, %v911
        %v917 = vpack.c.bf16 %v913, %v913
        %vm918 = vcmask 64512
        %v920 = vsel %vm918, %v666, 0
        %v923 = vsel %vm918, %v790, 0
        %925 = vmatpush.bf16.xpose.msra.mxu0 0
        %926 = vmatpush.bf16.xpose.msra.mxu0 0
        %927 = vmatpush.bf16.xpose.msra.mxu0 0
        %928 = vmatpush.bf16.xpose.msra.mxu0 0
        %929 = vmatpush.bf16.xpose.msra.mxu0 0
        %930 = vmatpush.bf16.xpose.msra.mxu0 0
        %931 = vmatpush.bf16.xpose.msra.mxu0 0
        %932 = vmatpush.bf16.xpose.msra.mxu0 %v923
        %933 = vmatmul.bf16.gmra.mxu0 %v920
        %v934 = vpop.f32.mrf.mxu0
        %v935 = vadd.f32 0.0, %v934
        %v936 = vpop.f32.mrf.mxu0
        %937 = vdwg.mxu0
        %v939 = vsel %vm918, %v667, 0
        %v942 = vsel %vm918, %v791, 0
        %944 = vmatpush.bf16.xpose.msra.mxu0 0
        %945 = vmatpush.bf16.xpose.msra.mxu0 0
        %946 = vmatpush.bf16.xpose.msra.mxu0 0
        %947 = vmatpush.bf16.xpose.msra.mxu0 0
        %948 = vmatpush.bf16.xpose.msra.mxu0 0
        %949 = vmatpush.bf16.xpose.msra.mxu0 0
        %950 = vmatpush.bf16.xpose.msra.mxu0 0
        %951 = vmatpush.bf16.xpose.msra.mxu0 %v942
        %952 = vmatmul.bf16.gmra.mxu0 %v939
        %v953 = vpop.f32.mrf.mxu0
        %v954 = vadd.f32 0.0, %v953
        %v955 = vpop.f32.mrf.mxu0
        %956 = vdwg.mxu0
        %v958 = vsel %vm918, %v668, 0
        %v961 = vsel %vm918, %v792, 0
        %963 = vmatpush.bf16.xpose.msra.mxu0 0
        %964 = vmatpush.bf16.xpose.msra.mxu0 0
        %965 = vmatpush.bf16.xpose.msra.mxu0 0
        %966 = vmatpush.bf16.xpose.msra.mxu0 0
        %967 = vmatpush.bf16.xpose.msra.mxu0 0
        %968 = vmatpush.bf16.xpose.msra.mxu0 0
        %969 = vmatpush.bf16.xpose.msra.mxu0 0
        %970 = vmatpush.bf16.xpose.msra.mxu0 %v961
        %971 = vmatmul.bf16.gmra.mxu0 %v958
        %v972 = vpop.f32.mrf.mxu0
        %v973 = vadd.f32 0.0, %v972
        %v974 = vpop.f32.mrf.mxu0
        %975 = vdwg.mxu0
        %v977 = vsel %vm918, %v669, 0
        %v980 = vsel %vm918, %v793, 0
        %982 = vmatpush.bf16.xpose.msra.mxu0 0
        %983 = vmatpush.bf16.xpose.msra.mxu0 0
        %984 = vmatpush.bf16.xpose.msra.mxu0 0
        %985 = vmatpush.bf16.xpose.msra.mxu0 0
        %986 = vmatpush.bf16.xpose.msra.mxu0 0
        %987 = vmatpush.bf16.xpose.msra.mxu0 0
        %988 = vmatpush.bf16.xpose.msra.mxu0 0
        %989 = vmatpush.bf16.xpose.msra.mxu0 %v980
        %990 = vmatmul.bf16.gmra.mxu0 %v977
        %v991 = vpop.f32.mrf.mxu0
        %v992 = vadd.f32 0.0, %v991
        %v993 = vpop.f32.mrf.mxu0
        %994 = vdwg.mxu0
        %v995 = vlaneseq
        %v996 = vshrl.u32 %v995, 7
        %v997 = vstv %s432
        %v998 = vadd.s32 %v997, %v996
        %v999 = vlaneseq
        %v1000 = vand.u32 %v999, 127
        %vm1001 = vcmp.ge.s32.totalorder %v998, %v1000
        %v1002 = vsel %vm1001, 1, 0
        %vm1003 = vcmp.eq.s32.totalorder %v1002, 1
        %v1004 = vsel %vm1003, %v935, -3.4028235e+38
        %v1005 = vsel %vm1003, %v954, -3.4028235e+38
        %v1006 = vsel %vm1003, %v973, -3.4028235e+38
        %v1007 = vsel %vm1003, %v992, -3.4028235e+38
        %v1008 = vsel %vm918, %v1004, -inf
        %1009 = vmax.xlane.f32.xlu0 %v1008
        %v1010 = vpop.xlane.xlu0 %1009
        %v1011 = vsel %vm918, %v1005, -inf
        %1012 = vmax.xlane.f32.xlu0 %v1011
        %v1013 = vpop.xlane.xlu0 %1012
        %v1014 = vsel %vm918, %v1006, -inf
        %1015 = vmax.xlane.f32.xlu0 %v1014
        %v1016 = vpop.xlane.xlu0 %1015
        %v1017 = vsel %vm918, %v1007, -inf
        %1018 = vmax.xlane.f32.xlu0 %v1017
        %v1019 = vpop.xlane.xlu0 %1018
        %v1020 = vsub.f32 %v1004, %v1010
        %v1021 = vsub.f32 %v1005, %v1013
        %v1022 = vsub.f32 %v1006, %v1016
        %v1023 = vsub.f32 %v1007, %v1019
        %v1024 = vmul.f32 %v1020, 1.442695
        %v1025 = vpow.pop %v1024
        %v1026 = vmul.f32 %v1021, 1.442695
        %v1027 = vpow.pop %v1026
        %v1028 = vmul.f32 %v1022, 1.442695
        %v1029 = vpow.pop %v1028
        %v1030 = vmul.f32 %v1023, 1.442695
        %v1031 = vpow.pop %v1030
        %v1032 = vsel %vm918, %v1025, 0.0
        %1033 = vadd.xlane.f32.xlu0 %v1032
        %v1034 = vpop.xlane.xlu0 %1033
        %v1035 = vsel %vm918, %v1027, 0.0
        %1036 = vadd.xlane.f32.xlu0 %v1035
        %v1037 = vpop.xlane.xlu0 %1036
        %v1038 = vsel %vm918, %v1029, 0.0
        %1039 = vadd.xlane.f32.xlu0 %v1038
        %v1040 = vpop.xlane.xlu0 %1039
        %v1041 = vsel %vm918, %v1031, 0.0
        %1042 = vadd.xlane.f32.xlu0 %v1041
        %v1043 = vpop.xlane.xlu0 %1042
        %v1044 = vrcp.pop %v1034
        %v1045 = vrcp.pop %v1037
        %v1046 = vrcp.pop %v1040
        %v1047 = vrcp.pop %v1043
        %v1048 = vmul.f32 %v1025, %v1044
        %v1049 = vmul.f32 %v1027, %v1045
        %v1050 = vmul.f32 %v1029, %v1046
        %v1051 = vmul.f32 %v1031, %v1047
        %v1052 = vpack.c.bf16 %v1048, %v1048
        %v1053 = vpack.c.bf16 %v1049, %v1049
        %v1054 = vpack.c.bf16 %v1050, %v1050
        %v1055 = vpack.c.bf16 %v1051, %v1051
        %v1057 = vsel %vm918, %v1052, 0
        %vm1059 = vcmask 1043456
        %v1061 = vsel %vm1059, %v914, 0
        %1063 = vmatpush.bf16.msra.mxu0 0
        %1064 = vmatpush.bf16.msra.mxu0 0
        %1065 = vmatpush.bf16.msra.mxu0 0
        %1066 = vmatpush.bf16.msra.mxu0 0
        %1067 = vmatpush.bf16.msra.mxu0 0
        %1068 = vmatpush.bf16.msra.mxu0 0
        %1069 = vmatpush.bf16.msra.mxu0 0
        %1070 = vmatpush.bf16.msra.mxu0 %v1061
        %1071 = vmatmul.bf16.gmra.mxu0 %v1057
        %v1072 = vpop.f32.mrf.mxu0
        %v1073 = vadd.f32 0.0, %v1072
        %v1074 = vpop.f32.mrf.mxu0
        %1075 = vdwg.mxu0
        %v1077 = vsel %vm918, %v1053, 0
        %v1080 = vsel %vm1059, %v915, 0
        %1082 = vmatpush.bf16.msra.mxu0 0
        %1083 = vmatpush.bf16.msra.mxu0 0
        %1084 = vmatpush.bf16.msra.mxu0 0
        %1085 = vmatpush.bf16.msra.mxu0 0
        %1086 = vmatpush.bf16.msra.mxu0 0
        %1087 = vmatpush.bf16.msra.mxu0 0
        %1088 = vmatpush.bf16.msra.mxu0 0
        %1089 = vmatpush.bf16.msra.mxu0 %v1080
        %1090 = vmatmul.bf16.gmra.mxu0 %v1077
        %v1091 = vpop.f32.mrf.mxu0
        %v1092 = vadd.f32 0.0, %v1091
        %v1093 = vpop.f32.mrf.mxu0
        %1094 = vdwg.mxu0
        %v1096 = vsel %vm918, %v1054, 0
        %v1099 = vsel %vm1059, %v916, 0
        %1101 = vmatpush.bf16.msra.mxu0 0
        %1102 = vmatpush.bf16.msra.mxu0 0
        %1103 = vmatpush.bf16.msra.mxu0 0
        %1104 = vmatpush.bf16.msra.mxu0 0
        %1105 = vmatpush.bf16.msra.mxu0 0
        %1106 = vmatpush.bf16.msra.mxu0 0
        %1107 = vmatpush.bf16.msra.mxu0 0
        %1108 = vmatpush.bf16.msra.mxu0 %v1099
        %1109 = vmatmul.bf16.gmra.mxu0 %v1096
        %v1110 = vpop.f32.mrf.mxu0
        %v1111 = vadd.f32 0.0, %v1110
        %v1112 = vpop.f32.mrf.mxu0
        %1113 = vdwg.mxu0
        %v1115 = vsel %vm918, %v1055, 0
        %v1118 = vsel %vm1059, %v917, 0
        %1120 = vmatpush.bf16.msra.mxu0 0
        %1121 = vmatpush.bf16.msra.mxu0 0
        %1122 = vmatpush.bf16.msra.mxu0 0
        %1123 = vmatpush.bf16.msra.mxu0 0
        %1124 = vmatpush.bf16.msra.mxu0 0
        %1125 = vmatpush.bf16.msra.mxu0 0
        %1126 = vmatpush.bf16.msra.mxu0 0
        %1127 = vmatpush.bf16.msra.mxu0 %v1118
        %1128 = vmatmul.bf16.gmra.mxu0 %v1115
        %v1129 = vpop.f32.mrf.mxu0
        %v1130 = vadd.f32 0.0, %v1129
        %v1131 = vpop.f32.mrf.mxu0
        %1132 = vdwg.mxu0
        %v1133 = vrot.slane %v1111, 4
        %v1134 = vsel %vm556, %v1133, %v1073
        %v1135 = vrot.slane %v1073, 4
        %v1136 = vsel %vm556, %v1111, %v1135
        %v1138 = vunpack.c.l.s4 1983009808
        %v1139 = vunpack.c.0.s8 %v1138
        %v1140 = vperm.slane %v1134, %v1139
        %v1142 = vunpack.c.l.s4 1983009808
        %v1143 = vunpack.c.0.s8 %v1142
        %v1144 = vperm.slane %v1136, %v1143
        %v1145 = vrot.slane %v1130, 4
        %v1146 = vsel %vm556, %v1145, %v1092
        %v1147 = vrot.slane %v1092, 4
        %v1148 = vsel %vm556, %v1130, %v1147
        %v1150 = vunpack.c.l.s4 1983009808
        %v1151 = vunpack.c.0.s8 %v1150
        %v1152 = vperm.slane %v1146, %v1151
        %v1154 = vunpack.c.l.s4 1983009808
        %v1155 = vunpack.c.0.s8 %v1154
        %v1156 = vperm.slane %v1148, %v1155
        %v1157 = vrot.slane %v1152, 4
        %v1158 = vsel %vm556, %v1157, %v1140
        %v1159 = vrot.slane %v1140, 4
        %v1160 = vsel %vm556, %v1152, %v1159
        %v1162 = vunpack.c.l.s4 1934713408
        %v1163 = vunpack.c.0.s8 %v1162
        %v1164 = vperm.slane %v1158, %v1163
        %v1166 = vunpack.c.l.s4 1934713408
        %v1167 = vunpack.c.0.s8 %v1166
        %v1168 = vperm.slane %v1160, %v1167
        %v1169 = vrot.slane %v1156, 4
        %v1170 = vsel %vm556, %v1169, %v1144
        %v1171 = vrot.slane %v1144, 4
        %v1172 = vsel %vm556, %v1156, %v1171
        %v1174 = vunpack.c.l.s4 1934713408
        %v1175 = vunpack.c.0.s8 %v1174
        %v1176 = vperm.slane %v1170, %v1175
        %v1178 = vunpack.c.l.s4 1934713408
        %v1179 = vunpack.c.0.s8 %v1178
        %v1180 = vperm.slane %v1172, %v1179
        %v1181 = vrot.slane %v1164, 4
        %v1182 = vsel %vm556, 0.0, %v1181
        %v1183 = vrot.slane %v1168, 4
        %v1184 = vsel %vm556, 0.0, %v1183
        %v1185 = vrot.slane %v1176, 4
        %v1186 = vsel %vm556, 0.0, %v1185
        %v1187 = vrot.slane %v1180, 4
        %v1188 = vsel %vm556, 0.0, %v1187
        %v1189 = vsel %vm556, %v1183, %v1164
        %v1191 = vunpack.c.l.s4 1983009808
        %v1192 = vunpack.c.0.s8 %v1191
        %v1193 = vperm.slane %v1189, %v1192
        %v1194 = vrot.slane %v1184, 4
        %v1195 = vsel %vm556, %v1194, %v1182
        %v1197 = vunpack.c.l.s4 1983009808
        %v1198 = vunpack.c.0.s8 %v1197
        %v1199 = vperm.slane %v1195, %v1198
        %v1200 = vsel %vm556, %v1187, %v1176
        %v1202 = vunpack.c.l.s4 1983009808
        %v1203 = vunpack.c.0.s8 %v1202
        %v1204 = vperm.slane %v1200, %v1203
        %v1205 = vrot.slane %v1188, 4
        %v1206 = vsel %vm556, %v1205, %v1186
        %v1208 = vunpack.c.l.s4 1983009808
        %v1209 = vunpack.c.0.s8 %v1208
        %v1210 = vperm.slane %v1206, %v1209
        %v1211 = vrot.slane %v1199, 4
        %v1212 = vsel %vm556, %v1211, %v1193
        %v1213 = vrot.slane %v1193, 4
        %v1214 = vsel %vm556, %v1199, %v1213
        %v1216 = vunpack.c.l.s4 1934713408
        %v1217 = vunpack.c.0.s8 %v1216
        %v1218 = vperm.slane %v1212, %v1217
        %v1220 = vunpack.c.l.s4 1934713408
        %v1221 = vunpack.c.0.s8 %v1220
        %v1222 = vperm.slane %v1214, %v1221
        %v1223 = vrot.slane %v1210, 4
        %v1224 = vsel %vm556, %v1223, %v1204
        %v1225 = vrot.slane %v1204, 4
        %v1226 = vsel %vm556, %v1210, %v1225
        %v1228 = vunpack.c.l.s4 1934713408
        %v1229 = vunpack.c.0.s8 %v1228
        %v1230 = vperm.slane %v1224, %v1229
        %v1232 = vunpack.c.l.s4 1934713408
        %v1233 = vunpack.c.0.s8 %v1232
        %v1234 = vperm.slane %v1226, %v1233
        %v1235 = vrot.slane %v1230, 4
        %v1236 = vsel %vm556, %v1235, %v1218
        %v1237 = vrot.slane %v1218, 4
        %v1238 = vsel %vm556, %v1230, %v1237
        %v1239 = vrot.slane %v1234, 4
        %v1240 = vsel %vm556, %v1239, %v1222
        %v1241 = vrot.slane %v1222, 4
        %v1242 = vsel %vm556, %v1234, %v1241
        %1244 = vrot.lane.b32.xlu0 %v1238, 8
        %v1245 = vpop.permute.xlu0 %1244
        %1248 = vrot.lane.b32.xlu0 %v1240, 16
        %v1249 = vpop.permute.xlu0 %1248
        %1252 = vrot.lane.b32.xlu0 %v1242, 24
        %v1253 = vpop.permute.xlu0 %1252
        %v1255 = vsel %vm918, %v1236, %v1245
        %vm1256 = vcmask 130048
        %v1257 = vsel %vm1256, %v1255, %v1249
        %vm1258 = vcmask 195584
        %v1259 = vsel %vm1258, %v1257, %v1253
        %v1260 = vpack.c.bf16 %v1259, %v1259
        %v1261 = vld [vmem:[#allocation10] sm:$0xf]
        %v1262 = vld [vmem:[#allocation10 + $0x4] sm:$0xf]
        %v1263 = vld [vmem:[#allocation10 + $0x8] sm:$0xf]
        %v1264 = vld [vmem:[#allocation10 + $0xc] sm:$0xf]
        %v1265 = vld [vmem:[%s8] sm:$0x1]
        %v1267 = vperm.slane %v1265, 0
        %v1273 = vunpack.c.l.b16 %v1261
        %v1274 = vunpack.c.l.b16 %v1262
        %v1275 = vunpack.c.l.b16 %v1263
        %v1276 = vunpack.c.l.b16 %v1264
        %v1277 = vpack.c.b16 %v1274, %v1273
        %v1278 = vpack.c.b16 %v1276, %v1275
        %v1282 = vsel %vm458, %v1260, 0
        %1284 = vmatpush.bf16.msra.mxu0 0
        %1285 = vmatpush.bf16.msra.mxu0 0
        %1286 = vmatpush.bf16.msra.mxu0 0
        %1287 = vmatpush.bf16.msra.mxu0 0
        %1288 = vmatpush.bf16.msra.mxu0 0
        %1289 = vmatpush.bf16.msra.mxu0 0
        %1290 = vmatpush.bf16.msra.mxu0 %v1278
        %1291 = vmatpush.bf16.msra.mxu0 %v1277
        %1292 = vmatmul.bf16.gmra.mxu0 %v1282
        %v1293 = vpop.f32.mrf.mxu0
        %v1294 = vadd.f32 %v1267, %v1293
        %v1295 = vpop.f32.mrf.mxu0
        %1296 = vdwg.mxu0
        %1297 = vst.msk [vmem:[%s429] sm:$0xff] %vm458, %v1294
        %s1298 = sand.u32 %s244, 1
        %s1299 = scalar_lea.sflag [#allocation4], %s1298
        %s1300 = sand.u32 %s244, 1
        %s1301 = smul.addr %s1300, 8
        %s1302 = scalar_lea.vmem [#allocation11], %s1301
        // Predicated region
        $region77: #{tpu_custom_call.1} parent=55 // pred_check
          %p1303 = pneg %p254
        $region78: #{tpu_custom_call.1} parent=55 // pred_check_branch
          %1305 = sbr.rel (%p1303) target = $region80
        $region79: #{tpu_custom_call.1} parent=55 // pred_region
          %1307 = vsyncadd %s1299, 0
          %s1308 = sadd.s32 %s33, %s32
          %s1309 = smul.addr %s1308, 8
          %s1310 = scalar_lea.hbm %s9, %s1309
          %s1312 = sshll.u32 %s1302, 4
          %s1313 = int_to_ptr.vmem [resolvable:$true] %s1312
          %s1314 = sshll.u32 %s1310, 4
          %s1315 = int_to_ptr.hbm [resolvable:$true] %s1314
          %1317 = dma.vmem_to_hbm [thread:$0]  %s1313, 128, %s1315, %s1299
        $region80: #{tpu_custom_call.1} parent=55 // pred_fallthru
          _
      $region56: #{tpu_custom_call.1} parent=5 // pred_fallthru
        _
      %p1318 = scmp.le.s32.totalorder 2, %s23
      // Predicated region
      $region81: #{tpu_custom_call.1} parent=5 // pred_check
        %p1319 = pneg %p1318
      $region82: #{tpu_custom_call.1} parent=5 // pred_check_branch
        %1321 = sbr.rel (%p1319) target = $region84
      $region83: #{tpu_custom_call.1} parent=5 // pred_region
        %s1322 = ssub.s32 %s23, 2
        // Predicated region
        $region85: #{tpu_custom_call.1} parent=83 // pred_check
          %p1323 = pneg %p260
        $region86: #{tpu_custom_call.1} parent=83 // pred_check_branch
          %1325 = sbr.rel (%p1323) target = $region88
        $region87: #{tpu_custom_call.1} parent=83 // pred_region
          %s1326 = sand.u32 %s245, 1
          %s1327 = scalar_lea.sflag [#allocation4], %s1326
          %s1328 = sand.u32 %s245, 1
          %s1329 = smul.addr %s1328, 8
          %s1330 = scalar_lea.vmem [#allocation11], %s1329
          %1332 = dma.done %s1327, 128
        $region88: #{tpu_custom_call.1} parent=83 // pred_fallthru
          _
      $region84: #{tpu_custom_call.1} parent=5 // pred_fallthru
        _
    $region6: #{tpu_custom_call.1} parent=1 // loop_footer
      %s27 = sadd.s32 1, %s23
    $region7: #{tpu_custom_call.1} parent=1 // loop_footer_branch
      %22 = sbr.rel target = $region3
    $region8: #{tpu_custom_call.1} parent=1 // loop_exit
      _
    %1333 = vsyncpa [#allocation3], 1
    %s1334 = scalar_lea.sflag [#allocation3], 1
    %1335 = vsyncpa %s1334, 1
    %1336 = vsyncpa [#allocation6], 1
    %1337 = vsyncpa [#allocation9], 1
    %1338 = vsyncpa [#allocation4], 1
    %s1339 = scalar_lea.sflag [#allocation4], 1
    %1340 = vsyncpa %s1339, 1

</llo_original>
